<compile_context>
chip_gen: v7x
topology: tpu7x:2x2x1
jax: 0.10.0
libtpu: 0.0.40
codegen_flags: <defaults>
</compile_context>

<pallas_src>
import math
from functools import partial

import jax
import jax.numpy as jnp
from jax import lax
from jax.experimental import pallas as pl
from jax.experimental.pallas import tpu as pltpu

# Large finite negative bias: masked logits underflow to 0 in exp (no -inf NaNs).
NEG_INF = -1e30


# --------------------------------------------------------------------------- #
# Small helpers                                                                #
# --------------------------------------------------------------------------- #
def _device_kind():
    try:
        return jax.devices()[0].device_kind.lower()
    except Exception:
        return ""


def _pick_tile(n, target, mult):
    """Largest tile <= target that divides n and is a multiple of `mult`;
    falls back to the full dimension (full blocks are always legal)."""
    if n <= target:
        return n
    t = (target // mult) * mult
    while t >= mult:
        if n % t == 0:
            return t
        t -= mult
    return n


def _pad_up(x, m):
    return ((x + m - 1) // m) * m


# --------------------------------------------------------------------------- #
# Projection kernel: head-major  out[b, hd, n, d_head] = x @ W[:, hd] + bias    #
# --------------------------------------------------------------------------- #
def _proj_kernel(g_heads, d_head, x_ref, w_ref, b_ref, o_ref):
    # x: (tr, d_in) bf16; w: (d_in, g*d_head) bf16; b: (1, g*d_head) f32
    acc = jnp.dot(x_ref[...], w_ref[...], preferred_element_type=jnp.float32)
    acc = acc + b_ref[...]
    # Static per-head lane slices write head-major output (no HBM transpose).
    for g in range(g_heads):
        o_ref[g] = acc[:, g * d_head:(g + 1) * d_head].astype(o_ref.dtype)


def _choose_head_group(h, d_in, d_head, weight_budget=16 * 1024 * 1024):
    """Head-group size (weight column tile): keep the double-buffered weight
    block under `weight_budget` while staying lane-legal (g*d_head % 128 == 0
    unless the full width is used)."""
    for g in range(h, 0, -1):
        if h % g != 0:
            continue
        if g != h and (g * d_head) % 128 != 0:
            continue
        if 2 * d_in * g * d_head * 2 <= weight_budget:
            return g
    return h


def _project_heads(x, w_t, bias, h, d_head, out_dtype, row_tile, vmem_limit):
    bsz, n, d_in = x.shape
    tr = _pick_tile(n, row_tile, 16)            # 16: bf16 sublane pack
    g = _choose_head_group(h, d_in, d_head)
    grid = (bsz, h // g, n // tr)

    cost = pl.CostEstimate(
        flops=2 * bsz * n * d_in * h * d_head,
        transcendentals=0,
        bytes_accessed=int(x.size * x.dtype.itemsize
                           + w_t.size * w_t.dtype.itemsize
                           + bsz * n * h * d_head * jnp.dtype(out_dtype).itemsize))

    return pl.pallas_call(
        partial(_proj_kernel, g, d_head),
        out_shape=jax.ShapeDtypeStruct((bsz, h, n, d_head), out_dtype),
        grid_spec=pltpu.PrefetchScalarGridSpec(
            num_scalar_prefetch=0,
            grid=grid,
            in_specs=[
                pl.BlockSpec((None, tr, d_in), lambda b, hg, i: (b, i, 0)),
                pl.BlockSpec((d_in, g * d_head), lambda b, hg, i: (0, hg)),
                pl.BlockSpec((1, g * d_head), lambda b, hg, i: (0, hg)),
            ],
            out_specs=pl.BlockSpec((None, g, tr, d_head),
                                   lambda b, hg, i: (b, hg, i, 0)),
        ),
        compiler_params=pltpu.CompilerParams(
            dimension_semantics=("parallel", "parallel", "parallel"),
            vmem_limit_bytes=vmem_limit),
        cost_estimate=cost,
    )(x, w_t, bias)


# --------------------------------------------------------------------------- #
# Flash attention + fused fc_o                                                  #
# grid = (batch, q_tile, kv_tile); all heads processed per step.                #
# --------------------------------------------------------------------------- #
def _flash_kernel(exp_dtype, lens_ref, q_ref, k_ref, v_ref, wo_ref, bo_ref,
                  o_ref, m_sc, l_sc, acc_sc):
    b = pl.program_id(0)
    ki = pl.program_id(2)
    n_kv = pl.num_programs(2)
    h = q_ref.shape[0]
    tk = k_ref.shape[1]
    valid_len = lens_ref[b]

    @pl.when(ki == 0)
    def _():
        m_sc[...] = jnp.full_like(m_sc, NEG_INF)
        l_sc[...] = jnp.zeros_like(l_sc)
        acc_sc[...] = jnp.zeros_like(acc_sc)

    # Fully-masked kv tiles: compute skipped here, DMA skipped via kv index_map.
    @pl.when(ki * tk < valid_len)
    def _():
        # Scores for all heads at once; q is pre-scaled by 1/sqrt(d_k).
        s = jnp.einsum("hqd,hkd->hqk", q_ref[...], k_ref[...],
                       preferred_element_type=jnp.float32)         # (h, tq, tk)
        # Rebuild the key-padding mask in-kernel (no (b, nq, nk) mask in HBM).
        key_idx = lax.broadcasted_iota(jnp.int32, (1, 1, tk), 2) + ki * tk
        s = jnp.where(key_idx < valid_len, s, NEG_INF)

        # Online (flash) softmax; bookkeeping in f32, exp in bf16 on v6e/v7x.
        m_prev = m_sc[...]                                          # (h, tq, 1)
        m_new = jnp.maximum(m_prev, jnp.max(s, axis=-1, keepdims=True))
        alpha = jnp.exp(m_prev - m_new)
        p = jnp.exp((s - m_new).astype(exp_dtype))
        l_sc[...] = alpha * l_sc[...] + jnp.sum(
            p.astype(jnp.float32), axis=-1, keepdims=True)
        acc_sc[...] = alpha * acc_sc[...] + jnp.einsum(
            "hqk,hkd->hqd", p.astype(v_ref.dtype), v_ref[...],
            preferred_element_type=jnp.float32)
        m_sc[...] = m_new

    @pl.when(ki == n_kv - 1)
    def _():
        # Normalize (EUP reciprocal) and fuse fc_o: per-head (tq,d_v)@(d_v,d_model)
        # summed directly into the VMEM-resident (tq, d_model) output block.
        inv_l = pl.reciprocal(l_sc[...], approx=True)               # (h, tq, 1)
        head_out = (acc_sc[...] * inv_l).astype(wo_ref.dtype)       # (h, tq, d_v)
        out = None
        for g in range(h):
            c = jnp.dot(head_out[g], wo_ref[g],
                        preferred_element_type=jnp.float32)         # (tq, d_model)
            out = c if out is None else out + c
        o_ref[...] = (out + bo_ref[...]).astype(o_ref.dtype)


def _flash_vmem_bytes(tq, tk, h, d_k, d_v, d_model):
    """Rough per-step VMEM footprint: double-buffered blocks + scratch + temps."""
    dkp, dvp, dmp = _pad_up(d_k, 128), _pad_up(d_v, 128), _pad_up(d_model, 128)
    tqp, tkp = _pad_up(tq, 16), _pad_up(tk, 16)
    b = 0
    b += 2 * h * tqp * dkp * 2                   # q blocks (x2 buffers, bf16)
    b += 2 * h * tkp * dkp * 2                   # k blocks
    b += 2 * h * tkp * dvp * 2                   # v blocks
    b += 2 * h * _pad_up(d_v, 16) * dmp * 2      # wo
    b += 2 * tqp * dmp * 4                       # output block (f32)
    b += 2 * h * tqp * 128 * 4                   # m, l scratch (lane-padded)
    b += h * tqp * dvp * 4                       # acc scratch
    b += 3 * h * tqp * _pad_up(tk, 128) * 4      # s / p / mask temporaries
    b += tqp * dmp * 4                           # fc_o temporary
    return b


def _choose_flash_tiles(nq, nk, h, d_k, d_v, d_model, budget,
                        max_q_tile=None, max_kv_tile=None):
    q_c = [t for t in (512, 256, 128, 64, 32, 16, 8)
           if t <= nq and nq % t == 0 and (max_q_tile is None or t <= max_q_tile)]
    if not q_c:
        q_c = [nq]
    k_c = [t for t in (1024, 512, 256, 128)
           if t <= nk and nk % t == 0 and (max_kv_tile is None or t <= max_kv_tile)]
    if not k_c:
        k_c = [nk]
    for tq in q_c:
        for tk in k_c:
            if _flash_vmem_bytes(tq, tk, h, d_k, d_v, d_model) <= budget:
                return tq, tk
    return q_c[-1], k_c[-1]


def _mask_to_lengths(attention_mask, b_s, nk):
    """Per-batch count of valid (unmasked) keys; the kernel reconstructs the
    key-padding mask (key index >= length == masked) from these lengths."""
    # TODO(synk): arbitrary per-query / non-contiguous masks would need a
    # streamed (b, 1, nk) mask block instead of scalar lengths.
    if attention_mask is None:
        return jnp.full((b_s,), nk, dtype=jnp.int32)
    am = jnp.asarray(attention_mask)
    if am.ndim == 3:
        am = am[:, 0, :]
    return (nk - jnp.sum(am.astype(jnp.int32), axis=-1)).astype(jnp.int32)


def scaled_dot_product_attention(queries, keys, values, attention_mask, params,
                                 d_k, d_v, h, max_q_tile=None, max_kv_tile=None):
    """queries: (b, nq, d_model); keys/values: (b, nk, d_model);
       attention_mask: bool key-padding mask (True == masked), shape
       (b, nq, nk) / (b, 1, nk) / (b, nk) or None.  Returns (b, nq, d_model) f32."""
    b_s, nq, d_model = queries.shape
    nk = keys.shape[1]
    cdt = jnp.bfloat16
    scale = 1.0 / math.sqrt(d_k)

    kind = _device_kind()
    is_v7 = ("v7" in kind) or ("tpu7" in kind)
    is_v6 = ("v6" in kind) or ("trillium" in kind)
    exp_dtype = jnp.bfloat16 if (is_v6 or is_v7) else jnp.float32   # v5e: f32 EUP only
    vmem_limit = (48 if is_v7 else 100 if (is_v6 or "v5" in kind) else 64) * 1024 * 1024
    row_tile = 256 if is_v7 else 512

    # Weights pre-transposed to (in, out); 1/sqrt(d_k) folded into fc_q.
    wq_t = (params["wq"].T * scale).astype(cdt)
    wk_t = params["wk"].T.astype(cdt)
    wv_t = params["wv"].T.astype(cdt)
    bq = (params["bq"] * scale).reshape(1, -1).astype(jnp.float32)
    bk = params["bk"].reshape(1, -1).astype(jnp.float32)
    bv = params["bv"].reshape(1, -1).astype(jnp.float32)

    # Head-major projections written directly by the kernels (no XLA transpose
    # of the big activations between the two pallas_calls).
    q_hm = _project_heads(queries.astype(cdt), wq_t, bq, h, d_k, cdt, row_tile, vmem_limit)
    k_hm = _project_heads(keys.astype(cdt),    wk_t, bk, h, d_k, cdt, row_tile, vmem_limit)
    v_hm = _project_heads(values.astype(cdt),  wv_t, bv, h, d_v, cdt, row_tile, vmem_limit)

    wo_h = params["wo"].T.reshape(h, d_v, d_model).astype(cdt)      # (h, d_v, d_model)
    bo = params["bo"].reshape(1, d_model).astype(jnp.float32)

    lens = _mask_to_lengths(attention_mask, b_s, nk)

    tq, tk = _choose_flash_tiles(nq, nk, h, d_k, d_v, d_model,
                                 int(vmem_limit * 0.85), max_q_tile, max_kv_tile)
    if is_v7 and b_s * (nq // tq) < 2:           # keep both v7x TensorCores busy
        smaller = [t for t in (256, 128, 64, 32, 16, 8) if t < tq and nq % t == 0]
        if smaller:
            tq = smaller[0]

    grid = (b_s, nq // tq, nk // tk)

    def q_map(b, qi, ki, lens_ref):
        return (b, 0, qi, 0)

    def kv_map(b, qi, ki, lens_ref):
        # Clamp fully-masked kv tiles to the last valid tile: same block index
        # as the previous step => their DMA is skipped (compute is skipped too).
        last = jnp.maximum((lens_ref[b] - 1) // tk, 0)
        return (b, 0, jnp.minimum(ki, last), 0)

    cost = pl.CostEstimate(
        flops=2 * b_s * h * nq * nk * (d_k + d_v) + 2 * b_s * nq * h * d_v * d_model,
        transcendentals=b_s * h * nq * nk,
        bytes_accessed=int((q_hm.size + k_hm.size + v_hm.size) * 2
                           + wo_h.size * 2 + b_s * nq * d_model * 4))

    return pl.pallas_call(
        partial(_flash_kernel, exp_dtype),
        out_shape=jax.ShapeDtypeStruct((b_s, nq, d_model), jnp.float32),
        grid_spec=pltpu.PrefetchScalarGridSpec(
            num_scalar_prefetch=1,
            grid=grid,
            in_specs=[
                pl.BlockSpec((None, h, tq, d_k), q_map),
                pl.BlockSpec((None, h, tk, d_k), kv_map),
                pl.BlockSpec((None, h, tk, d_v), kv_map),
                pl.BlockSpec((h, d_v, d_model), lambda b, qi, ki, lens_ref: (0, 0, 0)),
                pl.BlockSpec((1, d_model), lambda b, qi, ki, lens_ref: (0, 0)),
            ],
            out_specs=pl.BlockSpec((None, tq, d_model),
                                   lambda b, qi, ki, lens_ref: (b, qi, 0)),
            scratch_shapes=[
                pltpu.VMEM((h, tq, 1), jnp.float32),     # running max
                pltpu.VMEM((h, tq, 1), jnp.float32),     # running denominator
                pltpu.VMEM((h, tq, d_v), jnp.float32),   # per-head attention accumulator
            ],
        ),
        compiler_params=pltpu.CompilerParams(
            dimension_semantics=("parallel", "parallel", "arbitrary"),
            vmem_limit_bytes=vmem_limit),
        cost_estimate=cost,
    )(lens, q_hm, k_hm, v_hm, wo_h, bo)


# --------------------------------------------------------------------------- #
# Parameter init (torch Linear conventions) and pure-JAX reference             #
# --------------------------------------------------------------------------- #
def _xavier_uniform(key, out_f, in_f):
    limit = math.sqrt(6.0 / (in_f + out_f))
    return jax.random.uniform(key, (out_f, in_f), jnp.float32, -limit, limit)


def init_params(key, d_model, d_k, d_v, h):
    ks = jax.random.split(key, 4)
    return {
        "wq": _xavier_uniform(ks[0], h * d_k, d_model), "bq": jnp.zeros((h * d_k,), jnp.float32),
        "wk": _xavier_uniform(ks[1], h * d_k, d_model), "bk": jnp.zeros((h * d_k,), jnp.float32),
        "wv": _xavier_uniform(ks[2], h * d_v, d_model), "bv": jnp.zeros((h * d_v,), jnp.float32),
        "wo": _xavier_uniform(ks[3], d_model, h * d_v), "bo": jnp.zeros((d_model,), jnp.float32),
    }


def reference_attention(queries, keys, values, attention_mask, params, d_k, d_v, h):
    b_s, nq, d_model = queries.shape
    nk = keys.shape[1]
    q = (queries @ params["wq"].T + params["bq"]).reshape(b_s, nq, h, d_k).transpose(0, 2, 1, 3)
    k = (keys    @ params["wk"].T + params["bk"]).reshape(b_s, nk, h, d_k).transpose(0, 2, 3, 1)
    v = (values  @ params["wv"].T + params["bv"]).reshape(b_s, nk, h, d_v).transpose(0, 2, 1, 3)
    att = (q @ k) / math.sqrt(d_k)
    att = jnp.where(attention_mask[:, None, :, :], -jnp.inf, att)
    att = jax.nn.softmax(att, axis=-1)
    out = (att @ v).transpose(0, 2, 1, 3).reshape(b_s, nq, h * d_v)
    return out @ params["wo"].T + params["bo"]


def _run_case(seed_key, b_s, nq, nk, d_model, d_k, d_v, h, valid_len,
              max_q_tile=None, max_kv_tile=None):
    k_q, k_k, k_v, k_w = jax.random.split(seed_key, 4)
    queries = jax.random.normal(k_q, (b_s, nq, d_model), jnp.float32)
    keys_ = jax.random.normal(k_k, (b_s, nk, d_model), jnp.float32)
    values = jax.random.normal(k_v, (b_s, nk, d_model), jnp.float32)

    # Key-padding style mask (True == masked); every row has >= 1 valid key.
    key_idx = jnp.arange(nk)[None, None, :]
    attention_mask = jnp.broadcast_to(
        key_idx >= jnp.asarray(valid_len)[:, None, None], (b_s, nq, nk))

    params = init_params(k_w, d_model, d_k, d_v, h)

    out = scaled_dot_product_attention(queries, keys_, values, attention_mask,
                                       params, d_k, d_v, h,
                                       max_q_tile=max_q_tile, max_kv_tile=max_kv_tile)
    out = jax.block_until_ready(out)

    ref = reference_attention(queries, keys_, values, attention_mask, params, d_k, d_v, h)
    assert out.shape == (b_s, nq, d_model)
    assert not bool(jnp.any(jnp.isnan(out))), "NaN in kernel output"
    max_err = float(jnp.max(jnp.abs(out - ref)))
    assert jnp.allclose(out, ref, atol=3e-2, rtol=3e-2), \
        f"mismatch vs reference (max abs err {max_err})"


if __name__ == "__main__":
    root = jax.random.PRNGKey(0)
    k1, k2 = jax.random.split(root, 2)

    # Small case matching the module's typical toy shapes (single tile per axis).
    _run_case(k1, b_s=2, nq=8, nk=8, d_model=32, d_k=16, d_v=16, h=4,
              valid_len=[6, 7])

    # Multi-tile case: exercises q-tiling, the online-softmax kv loop, partial
    # mask tiles and skipped (fully-masked) kv tiles.  grid = (2, 2, 4).
    _run_case(k2, b_s=2, nq=256, nk=512, d_model=64, d_k=32, d_v=32, h=4,
              valid_len=[200, 512], max_q_tile=128, max_kv_tile=128)

    print("KERNEL_OK")
</pallas_src>

<mosaic_0001>
module attributes {stable_mosaic.version = 11 : i64} {
  func.func @_proj_kernel(%arg0: i32, %arg1: i32, %arg2: i32, %arg3: memref<1x8x32xbf16, #tpu.memory_space<vmem>>, %arg4: memref<32x64xbf16, #tpu.memory_space<vmem>>, %arg5: memref<1x64xf32, #tpu.memory_space<vmem>>, %arg6: memref<1x4x8x16xbf16, #tpu.memory_space<vmem>>) attributes {dimension_semantics = [#tpu.dimension_semantics<parallel>, #tpu.dimension_semantics<parallel>, #tpu.dimension_semantics<parallel>], iteration_bounds = array<i64: 2, 1, 1>, scalar_prefetch = 0 : i64, scratch_operands = 0 : i64, tpu.core_type = #tpu.core_type<tc>, window_params = [{transform_indices = @transform_0, window_bounds = array<i64: 1, 8, 32>}, {transform_indices = @transform_1, window_bounds = array<i64: 32, 64>}, {transform_indices = @transform_2, window_bounds = array<i64: 1, 64>}, {transform_indices = @transform_3, window_bounds = array<i64: 1, 4, 8, 16>}]} {
    %c0 = arith.constant 0 : index
    %c0_0 = arith.constant 0 : index
    %c0_1 = arith.constant 0 : index
    %0 = vector.load %arg3[%c0, %c0_0, %c0_1] : memref<1x8x32xbf16, #tpu.memory_space<vmem>>, vector<1x8x32xbf16>
    %1 = vector.shape_cast %0 : vector<1x8x32xbf16> to vector<8x32xbf16>
    %c0_2 = arith.constant 0 : index
    %c0_3 = arith.constant 0 : index
    %2 = vector.load %arg4[%c0_2, %c0_3] : memref<32x64xbf16, #tpu.memory_space<vmem>>, vector<32x64xbf16>
    %cst = arith.constant dense<0.000000e+00> : vector<8x64xf32>
    %3 = tpu.matmul %1, %2, %cst {dimension_numbers = #tpu.dot_dimension_numbers<[1], [0], [0], [1], [0, 0, 1, 1], [], []>} : vector<8x32xbf16>, vector<32x64xbf16>, vector<8x64xf32> -> vector<8x64xf32>
    %c0_4 = arith.constant 0 : index
    %c0_5 = arith.constant 0 : index
    %4 = vector.load %arg5[%c0_4, %c0_5] : memref<1x64xf32, #tpu.memory_space<vmem>>, vector<1x64xf32>
    %5 = vector.broadcast %4 : vector<1x64xf32> to vector<8x64xf32>
    %6 = arith.addf %3, %5 : vector<8x64xf32>
    %7 = vector.extract_strided_slice %6 {offsets = [0, 0], sizes = [8, 16], strides = [1, 1]} : vector<8x64xf32> to vector<8x16xf32>
    %8 = arith.truncf %7 : vector<8x16xf32> to vector<8x16xbf16>
    %c0_6 = arith.constant 0 : index
    %c0_7 = arith.constant 0 : index
    %c0_8 = arith.constant 0 : index
    %c0_9 = arith.constant 0 : index
    %9 = vector.load %arg6[%c0_6, %c0_7, %c0_8, %c0_9] : memref<1x4x8x16xbf16, #tpu.memory_space<vmem>>, vector<1x1x8x16xbf16>
    %10 = vector.shape_cast %9 : vector<1x1x8x16xbf16> to vector<8x16xbf16>
    %11 = vector.shape_cast %8 : vector<8x16xbf16> to vector<1x1x8x16xbf16>
    tpu.vector_store %arg6[%c0_6, %c0_7, %c0_8, %c0_9], %11 {strides = array<i32>} : memref<1x4x8x16xbf16, #tpu.memory_space<vmem>>, vector<1x1x8x16xbf16>,
    %12 = vector.extract_strided_slice %6 {offsets = [0, 16], sizes = [8, 16], strides = [1, 1]} : vector<8x64xf32> to vector<8x16xf32>
    %13 = arith.truncf %12 : vector<8x16xf32> to vector<8x16xbf16>
    %c0_10 = arith.constant 0 : index
    %c1 = arith.constant 1 : index
    %c0_11 = arith.constant 0 : index
    %c0_12 = arith.constant 0 : index
    %14 = vector.load %arg6[%c0_10, %c1, %c0_11, %c0_12] : memref<1x4x8x16xbf16, #tpu.memory_space<vmem>>, vector<1x1x8x16xbf16>
    %15 = vector.shape_cast %14 : vector<1x1x8x16xbf16> to vector<8x16xbf16>
    %16 = vector.shape_cast %13 : vector<8x16xbf16> to vector<1x1x8x16xbf16>
    tpu.vector_store %arg6[%c0_10, %c1, %c0_11, %c0_12], %16 {strides = array<i32>} : memref<1x4x8x16xbf16, #tpu.memory_space<vmem>>, vector<1x1x8x16xbf16>,
    %17 = vector.extract_strided_slice %6 {offsets = [0, 32], sizes = [8, 16], strides = [1, 1]} : vector<8x64xf32> to vector<8x16xf32>
    %18 = arith.truncf %17 : vector<8x16xf32> to vector<8x16xbf16>
    %c0_13 = arith.constant 0 : index
    %c2 = arith.constant 2 : index
    %c0_14 = arith.constant 0 : index
    %c0_15 = arith.constant 0 : index
    %19 = vector.load %arg6[%c0_13, %c2, %c0_14, %c0_15] : memref<1x4x8x16xbf16, #tpu.memory_space<vmem>>, vector<1x1x8x16xbf16>
    %20 = vector.shape_cast %19 : vector<1x1x8x16xbf16> to vector<8x16xbf16>
    %21 = vector.shape_cast %18 : vector<8x16xbf16> to vector<1x1x8x16xbf16>
    tpu.vector_store %arg6[%c0_13, %c2, %c0_14, %c0_15], %21 {strides = array<i32>} : memref<1x4x8x16xbf16, #tpu.memory_space<vmem>>, vector<1x1x8x16xbf16>,
    %22 = vector.extract_strided_slice %6 {offsets = [0, 48], sizes = [8, 16], strides = [1, 1]} : vector<8x64xf32> to vector<8x16xf32>
    %23 = arith.truncf %22 : vector<8x16xf32> to vector<8x16xbf16>
    %c0_16 = arith.constant 0 : index
    %c3 = arith.constant 3 : index
    %c0_17 = arith.constant 0 : index
    %c0_18 = arith.constant 0 : index
    %24 = vector.load %arg6[%c0_16, %c3, %c0_17, %c0_18] : memref<1x4x8x16xbf16, #tpu.memory_space<vmem>>, vector<1x1x8x16xbf16>
    %25 = vector.shape_cast %24 : vector<1x1x8x16xbf16> to vector<8x16xbf16>
    %26 = vector.shape_cast %23 : vector<8x16xbf16> to vector<1x1x8x16xbf16>
    tpu.vector_store %arg6[%c0_16, %c3, %c0_17, %c0_18], %26 {strides = array<i32>} : memref<1x4x8x16xbf16, #tpu.memory_space<vmem>>, vector<1x1x8x16xbf16>,
    return
  }
  func.func @transform_0(%arg0: i32, %arg1: i32, %arg2: i32) -> (i32, i32, i32) {
    %c0_i32 = arith.constant 0 : i32
    %c0_i32_0 = arith.constant 0 : i32
    return %arg0, %arg2, %c0_i32 : i32, i32, i32
  }
  func.func @transform_1(%arg0: i32, %arg1: i32, %arg2: i32) -> (i32, i32) {
    %c0_i32 = arith.constant 0 : i32
    %c0_i32_0 = arith.constant 0 : i32
    return %c0_i32, %arg1 : i32, i32
  }
  func.func @transform_2(%arg0: i32, %arg1: i32, %arg2: i32) -> (i32, i32) {
    %c0_i32 = arith.constant 0 : i32
    %c0_i32_0 = arith.constant 0 : i32
    return %c0_i32, %arg1 : i32, i32
  }
  func.func @transform_3(%arg0: i32, %arg1: i32, %arg2: i32) -> (i32, i32, i32, i32) {
    %c0_i32 = arith.constant 0 : i32
    %c0_i32_0 = arith.constant 0 : i32
    return %arg0, %arg1, %arg2, %c0_i32 : i32, i32, i32, i32
  }
}

</mosaic_0001>

<llo_original>
// kernel: tpu_custom_call.1
$region0: #{tpu_custom_call.1}
  #allocation0 [shape = 'u32[]', space=smem, size = 0x4, offset = 0x4, fixed_abs, tag = 'smem constant byte address 0x4 - core index']
  #allocation1 [shape = 'u32[144,128]{1,0:T(1,128)}', space=vmem, size = 0x12000, scoped, tag = 'internal scratch']
  %s0 = inlined_call_operand.hbm [shape: bf16[2,8,32], index: 0, kind: input, shape index: {}]
  %s1 = inlined_call_operand.hbm [shape: bf16[32,64], index: 1, kind: input, shape index: {}]
  %s2 = inlined_call_operand.hbm [shape: f32[1,64], index: 2, kind: input, shape index: {}]
  %s3 = inlined_call_operand.hbm [shape: bf16[2,4,8,16], index: 3, kind: output, shape index: {}]
  %s4 = sld [smem:[#allocation0]]
  $region57: #{tpu_custom_call.1} parent=0
    _
  %s6 = ssub.s32 1, %s4
  %s7 = scalar_select 0, %s6, %s4
  $region1: #{tpu_custom_call.1} parent=0
    #allocation2 [shape = 'u8[4096]{0}', space=vmem, size = 0x1000, scoped, tag = 'input window, operand 0']
    #allocation3 [shape = 's32[2]{0}', space=sflag, size = 0x8, scoped, tag = 'scoped memory for tpu_custom_call.1']
    #allocation4 [shape = 's32[2]{0}', space=sflag, size = 0x8, scoped, tag = 'scoped memory for tpu_custom_call.1']
    #allocation5 [shape = 'u8[8192]{0}', space=vmem, size = 0x2000, scoped, tag = 'input window, operand 1, single buffered']
    #allocation6 [shape = 's32[1]{0}', space=sflag, size = 0x4, scoped, tag = 'scoped memory for tpu_custom_call.1']
    #allocation7 [shape = 'u8[512]{0}', space=vmem, size = 0x400, scoped, tag = 'input window, operand 2, single buffered']
    #allocation8 [shape = 'u8[16384]{0}', space=vmem, size = 0x4000, scoped, tag = 'output window, operand 0']
    %8 = vsyncpa [#allocation3], 0
    %s9 = scalar_lea.sflag [#allocation3], 1
    %10 = vsyncpa %s9, 0
    %11 = vsyncpa [#allocation6], 0
    %12 = vsyncpa [#allocation4], 0
    %s13 = scalar_lea.sflag [#allocation4], 1
    %14 = vsyncpa %s13, 0
    loop: start=0, step=1, limit=4
    $region2: #{tpu_custom_call.1} parent=1 // loop_pre_header
      _
    $region3: #{tpu_custom_call.1} parent=1 // loop_header
      %s16 = sphi 0, %s20
      %p17 = scmp.ge.s32.totalorder %s16, 4
      %s23 = sphi 0, %s42
      %s24 = sphi 0, %s38
      %s25 = sphi 0, %s34
      %s26 = sphi 0, %s23
      %s27 = sphi 0, %s24
      %s28 = sphi 0, %s25
      %s29 = sphi 0, %s26
      %s30 = sphi 0, %s27
      %s31 = sphi 0, %s28
      %s47 = sphi 0, %s49
      %s50 = sphi 0, %s47
      %s51 = sphi 0, %s50
      %s67 = sphi 0, %s51
      %s73 = sphi 0, %s75
      %s76 = sphi 0, %s73
      %s77 = sphi 0, %s76
      %s93 = sphi 0, %s77
      %s99 = sphi 0, %s101
      %s102 = sphi 0, %s99
      %s103 = sphi 0, %s102
      %s119 = sphi 0, %s103
      %s129 = sphi 0, %s131
      %s132 = sphi 0, %s129
      %s133 = sphi 0, %s132
      %s149 = sphi 0, %s133
    $region4: #{tpu_custom_call.1} parent=1 // loop_header_branch
      %19 = sbr.rel (%p17) target = $region8
    $region5: #{tpu_custom_call.1} parent=1 // loop_body
      %s21 = ssub.s32 %s16, 1
      %s22 = ssub.s32 %s16, 2
      %s32 = sadd.s32 1, %s25
      %p33 = scmp.ge.s32.totalorder %s32, 1
      %s34 = scalar_select %p33, 0, %s32
      %s35 = sadd.s32 1, %s24
      %s36 = scalar_select %p33, %s35, %s24
      %p37 = scmp.ge.s32.totalorder %s36, 1
      %s38 = scalar_select %p37, 0, %s36
      %s39 = sadd.s32 1, %s23
      %s40 = scalar_select %p37, %s39, %s23
      %p41 = scmp.ge.s32.totalorder %s40, 2
      %s42 = scalar_select %p41, 0, %s40
      %s43 = ssub.s32 %s23, %s42
      %s44 = ssub.s32 %s25, %s34
      %s45 = sor.u32 %s43, %s44
      %p46 = scmp.eq.s32.totalorder %s45, 0
      %s48 = sadd.s32 %s47, 1
      %s49 = scalar_select %p46, %s47, %s48
      %p52 = pneg %p46
      %p53 = scmp.eq.s32.totalorder %s16, 1
      %p54 = por %p52, %p53
      %p55 = scmp.ne.s32.totalorder %s47, %s50
      %p56 = scmp.eq.s32.totalorder %s16, 0
      %p57 = por %p55, %p56
      %p58 = scmp.ne.s32.totalorder %s47, %s50
      %p59 = scmp.eq.s32.totalorder %s21, 1
      %p60 = por %p58, %p59
      %p61 = scmp.ne.s32.totalorder %s50, %s51
      %p62 = scmp.eq.s32.totalorder %s21, 0
      %p63 = por %p61, %p62
      %p64 = scmp.ne.s32.totalorder %s50, %s51
      %p65 = scmp.eq.s32.totalorder %s22, 1
      %p66 = por %p64, %p65
      %p68 = scmp.ne.s32.totalorder %s51, %s67
      %p69 = scmp.eq.s32.totalorder %s22, 0
      %p70 = por %p68, %p69
      %s71 = ssub.s32 %s24, %s38
      %p72 = scmp.eq.s32.totalorder %s71, 0
      %s74 = sadd.s32 %s73, 1
      %s75 = scalar_select %p72, %s73, %s74
      %p78 = pneg %p72
      %p79 = scmp.eq.s32.totalorder %s16, 1
      %p80 = por %p78, %p79
      %p81 = scmp.ne.s32.totalorder %s73, %s76
      %p82 = scmp.eq.s32.totalorder %s16, 0
      %p83 = por %p81, %p82
      %p84 = scmp.ne.s32.totalorder %s73, %s76
      %p85 = scmp.eq.s32.totalorder %s21, 1
      %p86 = por %p84, %p85
      %p87 = scmp.ne.s32.totalorder %s76, %s77
      %p88 = scmp.eq.s32.totalorder %s21, 0
      %p89 = por %p87, %p88
      %p90 = scmp.ne.s32.totalorder %s76, %s77
      %p91 = scmp.eq.s32.totalorder %s22, 1
      %p92 = por %p90, %p91
      %p94 = scmp.ne.s32.totalorder %s77, %s93
      %p95 = scmp.eq.s32.totalorder %s22, 0
      %p96 = por %p94, %p95
      %s97 = ssub.s32 %s24, %s38
      %p98 = scmp.eq.s32.totalorder %s97, 0
      %s100 = sadd.s32 %s99, 1
      %s101 = scalar_select %p98, %s99, %s100
      %p104 = pneg %p98
      %p105 = scmp.eq.s32.totalorder %s16, 1
      %p106 = por %p104, %p105
      %p107 = scmp.ne.s32.totalorder %s99, %s102
      %p108 = scmp.eq.s32.totalorder %s16, 0
      %p109 = por %p107, %p108
      %p110 = scmp.ne.s32.totalorder %s99, %s102
      %p111 = scmp.eq.s32.totalorder %s21, 1
      %p112 = por %p110, %p111
      %p113 = scmp.ne.s32.totalorder %s102, %s103
      %p114 = scmp.eq.s32.totalorder %s21, 0
      %p115 = por %p113, %p114
      %p116 = scmp.ne.s32.totalorder %s102, %s103
      %p117 = scmp.eq.s32.totalorder %s22, 1
      %p118 = por %p116, %p117
      %p120 = scmp.ne.s32.totalorder %s103, %s119
      %p121 = scmp.eq.s32.totalorder %s22, 0
      %p122 = por %p120, %p121
      %s123 = ssub.s32 %s23, %s42
      %s124 = ssub.s32 %s24, %s38
      %s125 = sor.u32 %s123, %s124
      %s126 = ssub.s32 %s25, %s34
      %s127 = sor.u32 %s125, %s126
      %p128 = scmp.eq.s32.totalorder %s127, 0
      %s130 = sadd.s32 %s129, 1
      %s131 = scalar_select %p128, %s129, %s130
      %p134 = pneg %p128
      %p135 = scmp.eq.s32.totalorder %s16, 1
      %p136 = por %p134, %p135
      %p137 = scmp.ne.s32.totalorder %s129, %s132
      %p138 = scmp.eq.s32.totalorder %s16, 0
      %p139 = por %p137, %p138
      %p140 = scmp.ne.s32.totalorder %s129, %s132
      %p141 = scmp.eq.s32.totalorder %s21, 1
      %p142 = por %p140, %p141
      %p143 = scmp.ne.s32.totalorder %s132, %s133
      %p144 = scmp.eq.s32.totalorder %s21, 0
      %p145 = por %p143, %p144
      %p146 = scmp.ne.s32.totalorder %s132, %s133
      %p147 = scmp.eq.s32.totalorder %s22, 1
      %p148 = por %p146, %p147
      %p150 = scmp.ne.s32.totalorder %s133, %s149
      %p151 = scmp.eq.s32.totalorder %s22, 0
      %p152 = por %p150, %p151
      %p153 = scmp.le.s32.totalorder 1, %s16
      %p154 = scmp.lt.s32.totalorder %s16, 3
      %p155 = pnand %p153, %p154
      %p156 = pneg %p155
      // Predicated region
      $region9: #{tpu_custom_call.1} parent=5 // pred_check
        _
      $region10: #{tpu_custom_call.1} parent=5 // pred_check_branch
        %158 = sbr.rel (%p155) target = $region12
      $region11: #{tpu_custom_call.1} parent=5 // pred_region
        %s159 = ssub.s32 %s16, 1
        // Predicated region
        $region13: #{tpu_custom_call.1} parent=11 // pred_check
          %p160 = pneg %p89
        $region14: #{tpu_custom_call.1} parent=11 // pred_check_branch
          %162 = sbr.rel (%p160) target = $region16
        $region15: #{tpu_custom_call.1} parent=11 // pred_region
          %s164 = ssub.s32 256, 256
          %165 = vsyncadd [#allocation6], %s164
          %s166 = smul.addr %s27, 64
          %s167 = scalar_lea.hbm %s1, %s166
          %s168 = sshll.u32 [#allocation5], 4
          %s169 = int_to_ptr.vmem [resolvable:$true] %s168
          %174 = dma.hbm_to_vmem [thread:$0]  %s167, 256, %s169, [#allocation6], 64, 64, 4
        $region16: #{tpu_custom_call.1} parent=11 // pred_fallthru
          _
        // Predicated region
        $region17: #{tpu_custom_call.1} parent=11 // pred_check
          %p175 = pneg %p115
        $region18: #{tpu_custom_call.1} parent=11 // pred_check_branch
          %177 = sbr.rel (%p175) target = $region20
        $region19: #{tpu_custom_call.1} parent=11 // pred_region
          %s179 = ssub.s32 16, 16
          %180 = vsyncadd [#allocation6], %s179
          %s181 = smul.addr %s27, 16
          %s182 = scalar_lea.hbm %s2, %s181
          %s184 = sshll.u32 [#allocation7], 4
          %s185 = int_to_ptr.vmem [resolvable:$true] %s184
          %187 = dma.hbm_to_vmem [thread:$0]  %s182, 16, %s185, [#allocation6]
        $region20: #{tpu_custom_call.1} parent=11 // pred_fallthru
          _
      $region12: #{tpu_custom_call.1} parent=5 // pred_fallthru
        _
      %p188 = scmp.lt.s32.totalorder %s16, 2
      // Predicated region
      $region21: #{tpu_custom_call.1} parent=5 // pred_check
        %p189 = pneg %p188
      $region22: #{tpu_custom_call.1} parent=5 // pred_check_branch
        %191 = sbr.rel (%p189) target = $region24
      $region23: #{tpu_custom_call.1} parent=5 // pred_region
        // Predicated region
        $region25: #{tpu_custom_call.1} parent=23 // pred_check
          %p192 = pneg %p57
        $region26: #{tpu_custom_call.1} parent=23 // pred_check_branch
          %194 = sbr.rel (%p192) target = $region28
        $region27: #{tpu_custom_call.1} parent=23 // pred_region
          %s195 = sand.u32 %s47, 1
          %s196 = scalar_lea.sflag [#allocation3], %s195
          %s197 = sand.u32 %s47, 1
          %s198 = smul.addr %s197, 4
          %s199 = scalar_lea.vmem [#allocation2], %s198
          %s201 = ssub.s32 64, 64
          %202 = vsyncadd %s196, %s201
          %s203 = sadd.s32 %s25, %s23
          %s204 = smul.addr %s203, 64
          %s205 = scalar_lea.hbm %s0, %s204
          %s207 = sshll.u32 %s199, 4
          %s208 = int_to_ptr.vmem [resolvable:$true] %s207
          %210 = dma.hbm_to_vmem [thread:$0]  %s205, 64, %s208, %s196
        $region28: #{tpu_custom_call.1} parent=23 // pred_fallthru
          _
      $region24: #{tpu_custom_call.1} parent=5 // pred_fallthru
        _
      %p211 = scmp.le.s32.totalorder 1, %s16
      %p212 = scmp.lt.s32.totalorder %s16, 3
      %p213 = pnand %p211, %p212
      %p214 = pneg %p213
      // Predicated region
      $region29: #{tpu_custom_call.1} parent=5 // pred_check
        _
      $region30: #{tpu_custom_call.1} parent=5 // pred_check_branch
        %216 = sbr.rel (%p213) target = $region32
      $region31: #{tpu_custom_call.1} parent=5 // pred_region
        %s217 = ssub.s32 %s16, 1
        %s218 = sand.u32 %s50, 1
        %s219 = scalar_lea.sflag [#allocation3], %s218
        %s220 = sand.u32 %s50, 1
        %s221 = smul.addr %s220, 4
        %s222 = scalar_lea.vmem [#allocation2], %s221
        // Predicated region
        $region33: #{tpu_custom_call.1} parent=31 // pred_check
          %p223 = pneg %p63
        $region34: #{tpu_custom_call.1} parent=31 // pred_check_branch
          %225 = sbr.rel (%p223) target = $region36
        $region35: #{tpu_custom_call.1} parent=31 // pred_region
          %226 = dma.done %s219, 64
        $region36: #{tpu_custom_call.1} parent=31 // pred_fallthru
          _
        // Predicated region
        $region37: #{tpu_custom_call.1} parent=31 // pred_check
          %p227 = pneg %p89
        $region38: #{tpu_custom_call.1} parent=31 // pred_check_branch
          %229 = sbr.rel (%p227) target = $region40
        $region39: #{tpu_custom_call.1} parent=31 // pred_region
          %230 = dma.done [#allocation6], 256
        $region40: #{tpu_custom_call.1} parent=31 // pred_fallthru
          _
        // Predicated region
        $region41: #{tpu_custom_call.1} parent=31 // pred_check
          %p231 = pneg %p115
        $region42: #{tpu_custom_call.1} parent=31 // pred_check_branch
          %233 = sbr.rel (%p231) target = $region44
        $region43: #{tpu_custom_call.1} parent=31 // pred_region
          %234 = dma.done [#allocation6], 16
        $region44: #{tpu_custom_call.1} parent=31 // pred_fallthru
          _
        %s235 = sand.u32 %s50, 1
        %s236 = scalar_lea.sflag [#allocation3], %s235
        %s237 = sand.u32 %s50, 1
        %s238 = smul.addr %s237, 4
        %s239 = scalar_lea.vmem [#allocation2], %s238
        %p240 = pneg %p63
        %p241 = pneg %p60
        %p242 = pneg %p89
        %p243 = pneg %p86
        %p244 = pneg %p115
        %p245 = pneg %p112
        %p246 = pneg %p145
        %p247 = pneg %p142
        %s248 = sand.u32 %s132, 1
        %s249 = scalar_lea.sflag [#allocation4], %s248
        %s250 = sand.u32 %s132, 1
        %s251 = smul.addr %s250, 16
        %s252 = scalar_lea.vmem [#allocation8], %s251
        %s253 = smul.u32 4, %s27
        %v255 = vld [vmem:[%s222] sm:$0xf]
        %v256 = vld [vmem:[#allocation5] sm:$0xf]
        %v257 = vld [vmem:[#allocation5 + $0x4] sm:$0xf]
        %v258 = vld [vmem:[#allocation5 + $0x8] sm:$0xf]
        %v259 = vld [vmem:[#allocation5 + $0xc] sm:$0xf]
        %v260 = vld [vmem:[#allocation7] sm:$0x1]
        %v262 = vlaneseq
        %v263 = vshrl.u32 %v262, 7
        %v264 = vsub.s32 0, %v263
        %v265 = vrot.slane %v260, %v264
        %v271 = vunpack.c.l.b16 %v256
        %v272 = vunpack.c.l.b16 %v257
        %v273 = vunpack.c.l.b16 %v258
        %v274 = vunpack.c.l.b16 %v259
        %v275 = vpack.c.b16 %v272, %v271
        %v276 = vpack.c.b16 %v274, %v273
        %vm279 = vcmask 261120
        %v281 = vsel %vm279, %v255, 0
        %283 = vmatprep.subr.bf16.mxu0 0
        %284 = vmatpush1.bf16.msra.mxu0 %v275
        %285 = vmatprep.subr.bf16.mxu0 0
        %286 = vmatpush1.bf16.msra.mxu0 %v276
        %287 = vmatprep.subr.bf16.mxu0 0
        %288 = vmatpush1.bf16.msra.mxu0 0
        %289 = vmatprep.subr.bf16.mxu0 0
        %290 = vmatpush1.bf16.msra.mxu0 0
        %291 = vmatprep.subr.bf16.mxu0 0
        %292 = vmatpush1.bf16.msra.mxu0 0
        %293 = vmatprep.subr.bf16.mxu0 0
        %294 = vmatpush1.bf16.msra.mxu0 0
        %295 = vmatprep.subr.bf16.mxu0 0
        %296 = vmatpush1.bf16.msra.mxu0 0
        %297 = vmatprep.subr.bf16.mxu0 0
        %298 = vmatpush1.bf16.msra.mxu0 0
        %299 = vmatprep.subr.bf16.mxu0 0
        %300 = vmatpush1.bf16.msra.mxu0 0
        %301 = vmatprep.subr.bf16.mxu0 0
        %302 = vmatpush1.bf16.msra.mxu0 0
        %303 = vmatprep.subr.bf16.mxu0 0
        %304 = vmatpush1.bf16.msra.mxu0 0
        %305 = vmatprep.subr.bf16.mxu0 0
        %306 = vmatpush1.bf16.msra.mxu0 0
        %307 = vmatprep.subr.bf16.mxu0 0
        %308 = vmatpush1.bf16.msra.mxu0 0
        %309 = vmatprep.subr.bf16.mxu0 0
        %310 = vmatpush1.bf16.msra.mxu0 0
        %311 = vmatprep.subr.bf16.mxu0 0
        %312 = vmatpush1.bf16.msra.mxu0 0
        %313 = vmatprep.subr.bf16.mxu0 0
        %314 = vmatpush1.bf16.msra.mxu0 0
        %315 = vmatprep.mubr.bf16.mxu0 0
        %316 = vmatmul.mubr.bf16.gmra.mrb[0].mxu0 %v281
        %v317 = vpop.f32.mrb[0].mxu0
        %v318 = vadd.f32 %v265, %v317
        %v319 = vpop.f32.mrb[0].mxu0
        %v320 = vpop.f32.mrb[0].mxu0
        %v321 = vpop.f32.mrb[0].mxu0
        %322 = vdwg.mxu0
        %v323 = vpack.c.bf16 %v318, %v318
        %vm324 = vcmask 125952
        %325 = vst.msk [vmem:[%s252] sm:$0xf] %vm324, %v323
        %v327 = vunpack.c.l.b16 %v323
        %v328 = vpack.c.b16 %v327, %v327
        %329 = vrot.lane.b32.xlu0 %v328, 112
        %v330 = vpop.permute.xlu0 %329
        %s332 = scalar_lea.vmem %s252, 4 [#allocation8]
        %333 = vst.msk [vmem:[%s332] sm:$0xf] %vm324, %v330
        %334 = vrot.lane.b32.xlu0 %v328, 96
        %v335 = vpop.permute.xlu0 %334
        %s337 = scalar_lea.vmem %s252, 8 [#allocation8]
        %338 = vst.msk [vmem:[%s337] sm:$0xf] %vm324, %v335
        %339 = vrot.lane.b32.xlu0 %v328, 80
        %v340 = vpop.permute.xlu0 %339
        %s342 = scalar_lea.vmem %s252, 12 [#allocation8]
        %343 = vst.msk [vmem:[%s342] sm:$0xf] %vm324, %v340
        %s344 = sand.u32 %s132, 1
        %s345 = scalar_lea.sflag [#allocation4], %s344
        %s346 = sand.u32 %s132, 1
        %s347 = smul.addr %s346, 16
        %s348 = scalar_lea.vmem [#allocation8], %s347
        // Predicated region
        $region45: #{tpu_custom_call.1} parent=31 // pred_check
          %p349 = pneg %p142
        $region46: #{tpu_custom_call.1} parent=31 // pred_check_branch
          %351 = sbr.rel (%p349) target = $region48
        $region47: #{tpu_custom_call.1} parent=31 // pred_region
          %s352 = smul.u32 4, %s27
          %s354 = ssub.s32 256, 256
          %355 = vsyncadd %s345, %s354
          %s356 = sadd.s32 %s28, %s352
          %s357 = smul.addr %s26, 4
          %s358 = sadd.s32 %s356, %s357
          %s359 = smul.addr %s358, 64
          %s360 = scalar_lea.hbm %s3, %s359
          %s361 = sshll.u32 %s348, 4
          %s362 = int_to_ptr.vmem [resolvable:$true] %s361
          %367 = dma.vmem_to_hbm [thread:$0]  %s362, 256, %s360, %s345, 64, 64, 4
        $region48: #{tpu_custom_call.1} parent=31 // pred_fallthru
          _
      $region32: #{tpu_custom_call.1} parent=5 // pred_fallthru
        _
      %p368 = scmp.le.s32.totalorder 2, %s16
      // Predicated region
      $region49: #{tpu_custom_call.1} parent=5 // pred_check
        %p369 = pneg %p368
      $region50: #{tpu_custom_call.1} parent=5 // pred_check_branch
        %371 = sbr.rel (%p369) target = $region52
      $region51: #{tpu_custom_call.1} parent=5 // pred_region
        %s372 = ssub.s32 %s16, 2
        // Predicated region
        $region53: #{tpu_custom_call.1} parent=51 // pred_check
          %p373 = pneg %p148
        $region54: #{tpu_custom_call.1} parent=51 // pred_check_branch
          %375 = sbr.rel (%p373) target = $region56
        $region55: #{tpu_custom_call.1} parent=51 // pred_region
          %s376 = sand.u32 %s133, 1
          %s377 = scalar_lea.sflag [#allocation4], %s376
          %s378 = sand.u32 %s133, 1
          %s379 = smul.addr %s378, 16
          %s380 = scalar_lea.vmem [#allocation8], %s379
          %381 = dma.done %s377, 256
        $region56: #{tpu_custom_call.1} parent=51 // pred_fallthru
          _
      $region52: #{tpu_custom_call.1} parent=5 // pred_fallthru
        _
    $region6: #{tpu_custom_call.1} parent=1 // loop_footer
      %s20 = sadd.s32 1, %s16
    $region7: #{tpu_custom_call.1} parent=1 // loop_footer_branch
      %15 = sbr.rel target = $region3
    $region8: #{tpu_custom_call.1} parent=1 // loop_exit
      _
    %382 = vsyncpa [#allocation3], 1
    %s383 = scalar_lea.sflag [#allocation3], 1
    %384 = vsyncpa %s383, 1
    %385 = vsyncpa [#allocation6], 1
    %386 = vsyncpa [#allocation4], 1
    %s387 = scalar_lea.sflag [#allocation4], 1
    %388 = vsyncpa %s387, 1

</llo_original>
